<compile_context>
chip_gen: v7x
topology: tpu7x:2x2x1
jax: 0.10.0
libtpu: 0.0.40
codegen_flags: <defaults>
</compile_context>

<pallas_src>
import jax
import jax.numpy as jnp
from jax.experimental import pallas as pl
from jax.experimental.pallas import tpu as pltpu


def _attention_layer_kernel(x_ref, w1t_ref, b1_ref, w2t_ref, b2_ref, o_ref):
    # x_ref:   (tb, dim)       tile of input rows
    # w1t_ref: (dim, hidden)   layer1 weight, pre-transposed (resident)
    # b1_ref:  (1, hidden)     layer1 bias
    # w2t_ref: (hidden, dim)   layer2 weight, pre-transposed (resident)
    # b2_ref:  (1, dim)        layer2 bias
    # o_ref:   (tb, dim)       sigmoid gate (unsqueeze done outside)

    # layer1 + ReLU (MXU matmul, f32 accumulate; operands stay in native dtype)
    h = jnp.dot(x_ref[...], w1t_ref[...], preferred_element_type=jnp.float32)
    h = jnp.maximum(h + b1_ref[...], 0.0)

    # layer2 + sigmoid (sigmoid -> EUP, free slot alongside stores)
    y = jnp.dot(h, w2t_ref[...], preferred_element_type=jnp.float32)
    y = y + b2_ref[...]
    o_ref[...] = jax.nn.sigmoid(y).astype(o_ref.dtype)


def _round_up(n, m):
    return ((n + m - 1) // m) * m


def attention_layer(x, w1, b1, w2, b2, *, max_tb=8192):
    """Attentionlayer.forward:  sigmoid(relu(x @ W1.T + b1) @ W2.T + b2)[..., None]

    x : (..., dim)          arbitrary leading dims (nn.Linear semantics)
    w1: (hidden, dim)  b1: (hidden,)   -- PyTorch Linear layout
    w2: (dim, hidden)  b2: (dim,)
    returns (..., dim, 1)
    """
    *lead, dim = x.shape
    hidden = w1.shape[0]

    x2 = x.reshape(-1, dim)
    B = x2.shape[0]

    # Row tile: ~1 MiB per (tb, dim) block (memory-bound kernel -> big tiles
    # amortize the ~0.35 us/step pipeline overhead), multiple of 8 for the
    # (8,128) layout rule, capped by max_tb.  4 double-buffered blocks of
    # 1 MiB (~4 MiB VMEM) + tiny resident weights fit every generation.
    itemsize = jnp.dtype(x.dtype).itemsize
    tb_target = max(512, (1 << 20) // max(1, dim * itemsize))
    tb_target = min(_round_up(tb_target, 8), max(8, _round_up(max_tb, 8)))
    tb = min(tb_target, _round_up(B, 8))
    grid = pl.cdiv(B, tb)

    # One-time wrapper-side transposes / reshapes (tiny, done by XLA once).
    w1t = w1.T                     # (dim, hidden)
    w2t = w2.T                     # (hidden, dim)
    b1r = b1.reshape(1, hidden)
    b2r = b2.reshape(1, dim)

    out = pl.pallas_call(
        _attention_layer_kernel,
        out_shape=jax.ShapeDtypeStruct((B, dim), x.dtype),
        grid_spec=pltpu.PrefetchScalarGridSpec(
            num_scalar_prefetch=0,
            grid=(grid,),
            in_specs=[
                pl.BlockSpec((tb, dim), lambda i: (i, 0)),       # x row tile
                pl.BlockSpec((dim, hidden), lambda i: (0, 0)),   # W1^T (full, resident)
                pl.BlockSpec((1, hidden), lambda i: (0, 0)),     # b1
                pl.BlockSpec((hidden, dim), lambda i: (0, 0)),   # W2^T (full, resident)
                pl.BlockSpec((1, dim), lambda i: (0, 0)),        # b2
            ],
            out_specs=pl.BlockSpec((tb, dim), lambda i: (i, 0)),
        ),
        compiler_params=pltpu.CompilerParams(
            dimension_semantics=("parallel",)),
    )(x2, w1t, b1r, w2t, b2r)

    out = out.reshape(*lead, dim)
    return out[..., None]   # unsqueeze(-1), pure glue


def attention_layer_ref(x, w1, b1, w2, b2):
    h = jnp.maximum(x @ w1.T + b1, 0.0)
    return jax.nn.sigmoid(h @ w2.T + b2)[..., None]


if __name__ == "__main__":
    # Attentionlayer(dim=64, r=16)  ->  layer1: 64 -> 4, layer2: 4 -> 64
    dim, r = 64, 16
    hidden = dim // r

    key = jax.random.PRNGKey(0)
    k_x, k_w1, k_b1, k_w2, k_b2, k_x3 = jax.random.split(key, 6)

    # Synthetic params, PyTorch Linear layout: (out, in), (out,)
    w1 = jax.random.normal(k_w1, (hidden, dim), dtype=jnp.float32) * 0.1
    b1 = jax.random.normal(k_b1, (hidden,), dtype=jnp.float32) * 0.1
    w2 = jax.random.normal(k_w2, (dim, hidden), dtype=jnp.float32) * 0.1
    b2 = jax.random.normal(k_b2, (dim,), dtype=jnp.float32) * 0.1

    # Case 1: (B, dim) with B not a multiple of 8 -> single partial block,
    # exercises masked last-block stores with grid == 1.
    x = jax.random.normal(k_x, (22, dim), dtype=jnp.float32)
    out = jax.block_until_ready(attention_layer(x, w1, b1, w2, b2))
    ref = attention_layer_ref(x, w1, b1, w2, b2)
    assert out.shape == (22, dim, 1), out.shape
    assert jnp.allclose(out, ref, atol=1e-5, rtol=1e-5), "mismatch vs reference (2-D)"

    # Case 2: leading batch dims + forced multi-step grid (small max_tb) ->
    # exercises cdiv grid (3 steps), a partial final block, and multi-tile
    # pipelining / megacore sharding.
    x3 = jax.random.normal(k_x3, (2, 150, dim), dtype=jnp.float32)
    out3 = jax.block_until_ready(attention_layer(x3, w1, b1, w2, b2, max_tb=128))
    ref3 = attention_layer_ref(x3, w1, b1, w2, b2)
    assert out3.shape == (2, 150, dim, 1), out3.shape
    assert jnp.allclose(out3, ref3, atol=1e-5, rtol=1e-5), "mismatch vs reference (3-D)"

    print("KERNEL_OK")
</pallas_src>

<mosaic_0001>
module attributes {stable_mosaic.version = 11 : i64} {
  func.func @_attention_layer_kernel(%arg0: i32, %arg1: memref<24x64xf32, #tpu.memory_space<vmem>>, %arg2: memref<64x4xf32, #tpu.memory_space<vmem>>, %arg3: memref<1x4xf32, #tpu.memory_space<vmem>>, %arg4: memref<4x64xf32, #tpu.memory_space<vmem>>, %arg5: memref<1x64xf32, #tpu.memory_space<vmem>>, %arg6: memref<24x64xf32, #tpu.memory_space<vmem>>) attributes {dimension_semantics = [#tpu.dimension_semantics<parallel>], iteration_bounds = array<i64: 1>, scalar_prefetch = 0 : i64, scratch_operands = 0 : i64, tpu.core_type = #tpu.core_type<tc>, window_params = [{transform_indices = @transform_0, window_bounds = array<i64: 24, 64>}, {pipeline_mode = #tpu.pipeline_mode<synchronous>, transform_indices = @transform_1, window_bounds = array<i64: 64, 4>}, {pipeline_mode = #tpu.pipeline_mode<synchronous>, transform_indices = @transform_2, window_bounds = array<i64: 1, 4>}, {pipeline_mode = #tpu.pipeline_mode<synchronous>, transform_indices = @transform_3, window_bounds = array<i64: 4, 64>}, {pipeline_mode = #tpu.pipeline_mode<synchronous>, transform_indices = @transform_4, window_bounds = array<i64: 1, 64>}, {transform_indices = @transform_5, window_bounds = array<i64: 24, 64>}]} {
    %c0 = arith.constant 0 : index
    %c0_0 = arith.constant 0 : index
    %0 = vector.load %arg1[%c0, %c0_0] : memref<24x64xf32, #tpu.memory_space<vmem>>, vector<24x64xf32>
    %c0_1 = arith.constant 0 : index
    %c0_2 = arith.constant 0 : index
    %1 = vector.load %arg2[%c0_1, %c0_2] : memref<64x4xf32, #tpu.memory_space<vmem>>, vector<64x4xf32>
    %cst = arith.constant dense<0.000000e+00> : vector<24x4xf32>
    %2 = tpu.matmul %0, %1, %cst {dimension_numbers = #tpu.dot_dimension_numbers<[1], [0], [0], [1], [0, 0, 1, 1], [], []>} : vector<24x64xf32>, vector<64x4xf32>, vector<24x4xf32> -> vector<24x4xf32>
    %c0_3 = arith.constant 0 : index
    %c0_4 = arith.constant 0 : index
    %3 = vector.load %arg3[%c0_3, %c0_4] : memref<1x4xf32, #tpu.memory_space<vmem>>, vector<1x4xf32>
    %4 = vector.broadcast %3 : vector<1x4xf32> to vector<24x4xf32>
    %5 = arith.addf %2, %4 : vector<24x4xf32>
    %cst_5 = arith.constant 0.000000e+00 : f32
    %6 = vector.broadcast %cst_5 : f32 to vector<24x4xf32>
    %7 = arith.maximumf %5, %6 : vector<24x4xf32>
    %c0_6 = arith.constant 0 : index
    %c0_7 = arith.constant 0 : index
    %8 = vector.load %arg4[%c0_6, %c0_7] : memref<4x64xf32, #tpu.memory_space<vmem>>, vector<4x64xf32>
    %cst_8 = arith.constant dense<0.000000e+00> : vector<24x64xf32>
    %9 = tpu.matmul %7, %8, %cst_8 {dimension_numbers = #tpu.dot_dimension_numbers<[1], [0], [0], [1], [0, 0, 1, 1], [], []>} : vector<24x4xf32>, vector<4x64xf32>, vector<24x64xf32> -> vector<24x64xf32>
    %c0_9 = arith.constant 0 : index
    %c0_10 = arith.constant 0 : index
    %10 = vector.load %arg5[%c0_9, %c0_10] : memref<1x64xf32, #tpu.memory_space<vmem>>, vector<1x64xf32>
    %11 = vector.broadcast %10 : vector<1x64xf32> to vector<24x64xf32>
    %12 = arith.addf %9, %11 : vector<24x64xf32>
    %13 = arith.negf %12 : vector<24x64xf32>
    %14 = math.exp %13 : vector<24x64xf32>
    %cst_11 = arith.constant 1.000000e+00 : f32
    %15 = vector.broadcast %cst_11 : f32 to vector<24x64xf32>
    %16 = arith.addf %15, %14 : vector<24x64xf32>
    %17 = arith.divf %15, %16 : vector<24x64xf32>
    %c0_12 = arith.constant 0 : index
    %c0_13 = arith.constant 0 : index
    %18 = vector.load %arg6[%c0_12, %c0_13] : memref<24x64xf32, #tpu.memory_space<vmem>>, vector<24x64xf32>
    tpu.vector_store %arg6[%c0_12, %c0_13], %17 {strides = array<i32>} : memref<24x64xf32, #tpu.memory_space<vmem>>, vector<24x64xf32>,
    return
  }
  func.func @transform_0(%arg0: i32) -> (i32, i32) {
    %c0_i32 = arith.constant 0 : i32
    %c0_i32_0 = arith.constant 0 : i32
    return %arg0, %c0_i32 : i32, i32
  }
  func.func @transform_1(%arg0: i32) -> (i32, i32) {
    %c0_i32 = arith.constant 0 : i32
    %c0_i32_0 = arith.constant 0 : i32
    %c0_i32_1 = arith.constant 0 : i32
    return %c0_i32, %c0_i32_0 : i32, i32
  }
  func.func @transform_2(%arg0: i32) -> (i32, i32) {
    %c0_i32 = arith.constant 0 : i32
    %c0_i32_0 = arith.constant 0 : i32
    %c0_i32_1 = arith.constant 0 : i32
    return %c0_i32, %c0_i32_0 : i32, i32
  }
  func.func @transform_3(%arg0: i32) -> (i32, i32) {
    %c0_i32 = arith.constant 0 : i32
    %c0_i32_0 = arith.constant 0 : i32
    %c0_i32_1 = arith.constant 0 : i32
    return %c0_i32, %c0_i32_0 : i32, i32
  }
  func.func @transform_4(%arg0: i32) -> (i32, i32) {
    %c0_i32 = arith.constant 0 : i32
    %c0_i32_0 = arith.constant 0 : i32
    %c0_i32_1 = arith.constant 0 : i32
    return %c0_i32, %c0_i32_0 : i32, i32
  }
  func.func @transform_5(%arg0: i32) -> (i32, i32) {
    %c0_i32 = arith.constant 0 : i32
    %c0_i32_0 = arith.constant 0 : i32
    return %arg0, %c0_i32 : i32, i32
  }
}

</mosaic_0001>

<llo_original>
// kernel: tpu_custom_call.1
$region0: #{tpu_custom_call.1}
  #allocation0 [shape = 'u32[]', space=smem, size = 0x4, offset = 0x4, fixed_abs, tag = 'smem constant byte address 0x4 - core index']
  #allocation1 [shape = 'u32[144,128]{1,0:T(1,128)}', space=vmem, size = 0x12000, scoped, tag = 'internal scratch']
  %s0 = inlined_call_operand.vmem [shape: f32[22,64], index: 0, kind: input, shape index: {}]
  %s1 = inlined_call_operand.vmem [shape: f32[64,4], index: 1, kind: input, shape index: {}]
  %s2 = inlined_call_operand.vmem [shape: f32[1,4], index: 2, kind: input, shape index: {}]
  %s3 = inlined_call_operand.vmem [shape: f32[4,64], index: 3, kind: input, shape index: {}]
  %s4 = inlined_call_operand.vmem [shape: f32[1,64], index: 4, kind: input, shape index: {}]
  %s5 = inlined_call_operand.hbm [shape: f32[22,64], index: 5, kind: output, shape index: {}]
  %s6 = sld [smem:[#allocation0]]
  $region30: #{tpu_custom_call.1} parent=0
    _
  %s8 = ssub.s32 1, %s6
  %s9 = scalar_select 0, %s8, %s6
  $region1: #{tpu_custom_call.1} parent=0
    #allocation2 [shape = 'u8[12288]{0}', space=vmem, size = 0x3000, scoped, tag = 'output window, operand 0, single buffered']
    #allocation3 [shape = 's32[1]{0}', space=sflag, size = 0x4, scoped, tag = 'scoped memory for tpu_custom_call.1']
    %10 = vsyncpa [#allocation3], 0
    // Predicated region
    $region2: #{tpu_custom_call.1} parent=1 // pred_check
      _
    $region3: #{tpu_custom_call.1} parent=1 // pred_check_branch
      %12 = sbr.rel (0) target = $region5
    $region4: #{tpu_custom_call.1} parent=1 // pred_region
      _
    $region5: #{tpu_custom_call.1} parent=1 // pred_fallthru
      _
    // Predicated region
    $region6: #{tpu_custom_call.1} parent=1 // pred_check
      _
    $region7: #{tpu_custom_call.1} parent=1 // pred_check_branch
      %14 = sbr.rel (0) target = $region9
    $region8: #{tpu_custom_call.1} parent=1 // pred_region
      _
    $region9: #{tpu_custom_call.1} parent=1 // pred_fallthru
      _
    // Predicated region
    $region10: #{tpu_custom_call.1} parent=1 // pred_check
      _
    $region11: #{tpu_custom_call.1} parent=1 // pred_check_branch
      %16 = sbr.rel (0) target = $region13
    $region12: #{tpu_custom_call.1} parent=1 // pred_region
      _
    $region13: #{tpu_custom_call.1} parent=1 // pred_fallthru
      _
    // Predicated region
    $region14: #{tpu_custom_call.1} parent=1 // pred_check
      _
    $region15: #{tpu_custom_call.1} parent=1 // pred_check_branch
      %18 = sbr.rel (0) target = $region17
    $region16: #{tpu_custom_call.1} parent=1 // pred_region
      _
    $region17: #{tpu_custom_call.1} parent=1 // pred_fallthru
      _
    // Predicated region
    $region18: #{tpu_custom_call.1} parent=1 // pred_check
      _
    $region19: #{tpu_custom_call.1} parent=1 // pred_check_branch
      %20 = sbr.rel (0) target = $region21
    $region20: #{tpu_custom_call.1} parent=1 // pred_region
      _
    $region21: #{tpu_custom_call.1} parent=1 // pred_fallthru
      _
    %v21 = vld [vmem:[%s0] sm:$0xff]
    %v22 = vld [vmem:[%s0 + $0x8] sm:$0xff]
    %v23 = vld [vmem:[%s0 + $0x10] sm:$0xff]
    %v24 = vld [vmem:[%s1] sm:$0xff]
    %v25 = vld [vmem:[%s1 + $0x8] sm:$0xff]
    %v26 = vld [vmem:[%s1 + $0x10] sm:$0xff]
    %v27 = vld [vmem:[%s1 + $0x18] sm:$0xff]
    %v28 = vld [vmem:[%s1 + $0x20] sm:$0xff]
    %v29 = vld [vmem:[%s1 + $0x28] sm:$0xff]
    %v30 = vld [vmem:[%s1 + $0x30] sm:$0xff]
    %v31 = vld [vmem:[%s1 + $0x38] sm:$0xff]
    %v32 = vld [vmem:[%s2] sm:$0x1]
    %v34 = vlaneseq
    %v35 = vshrl.u32 %v34, 7
    %v36 = vsub.s32 0, %v35
    %v37 = vrot.slane %v32, %v36
    %vm39 = vcmask 523264
    %v41 = vsel %vm39, %v21, 0
    %v44 = vsel %vm39, %v22, 0
    %v47 = vsel %vm39, %v23, 0
    %49 = vmatprep.subr.mxu0 0.0
    %50 = vmatpush1.msra.mxu0 %v24
    %51 = vmatprep.subr.mxu0 0.0
    %52 = vmatpush1.msra.mxu0 %v25
    %53 = vmatprep.subr.mxu0 0.0
    %54 = vmatpush1.msra.mxu0 %v26
    %55 = vmatprep.subr.mxu0 0.0
    %56 = vmatpush1.msra.mxu0 %v27
    %57 = vmatprep.subr.mxu0 0.0
    %58 = vmatpush1.msra.mxu0 %v28
    %59 = vmatprep.subr.mxu0 0.0
    %60 = vmatpush1.msra.mxu0 %v29
    %61 = vmatprep.subr.mxu0 0.0
    %62 = vmatpush1.msra.mxu0 %v30
    %63 = vmatprep.subr.mxu0 0.0
    %64 = vmatpush1.msra.mxu0 %v31
    %65 = vmatprep.subr.mxu0 0.0
    %66 = vmatpush1.msra.mxu0 0.0
    %67 = vmatprep.subr.mxu0 0.0
    %68 = vmatpush1.msra.mxu0 0.0
    %69 = vmatprep.subr.mxu0 0.0
    %70 = vmatpush1.msra.mxu0 0.0
    %71 = vmatprep.subr.mxu0 0.0
    %72 = vmatpush1.msra.mxu0 0.0
    %73 = vmatprep.subr.mxu0 0.0
    %74 = vmatpush1.msra.mxu0 0.0
    %75 = vmatprep.subr.mxu0 0.0
    %76 = vmatpush1.msra.mxu0 0.0
    %77 = vmatprep.subr.mxu0 0.0
    %78 = vmatpush1.msra.mxu0 0.0
    %79 = vmatprep.subr.mxu0 0.0
    %80 = vmatpush1.msra.mxu0 0.0
    %81 = vmatprep.subr.mxu0 0.0
    %82 = vmatpush1.msra.mxu0 0.0
    %83 = vmatprep.subr.mxu0 0.0
    %84 = vmatpush1.msra.mxu0 0.0
    %85 = vmatprep.subr.mxu0 0.0
    %86 = vmatpush1.msra.mxu0 0.0
    %87 = vmatprep.subr.mxu0 0.0
    %88 = vmatpush1.msra.mxu0 0.0
    %89 = vmatprep.subr.mxu0 0.0
    %90 = vmatpush1.msra.mxu0 0.0
    %91 = vmatprep.subr.mxu0 0.0
    %92 = vmatpush1.msra.mxu0 0.0
    %93 = vmatprep.subr.mxu0 0.0
    %94 = vmatpush1.msra.mxu0 0.0
    %95 = vmatprep.subr.mxu0 0.0
    %96 = vmatpush1.msra.mxu0 0.0
    %97 = vmatprep.subr.mxu0 0.0
    %98 = vmatpush1.msra.mxu0 0.0
    %99 = vmatprep.subr.mxu0 0.0
    %100 = vmatpush1.msra.mxu0 0.0
    %101 = vmatprep.subr.mxu0 0.0
    %102 = vmatpush1.msra.mxu0 0.0
    %103 = vmatprep.subr.mxu0 0.0
    %104 = vmatpush1.msra.mxu0 0.0
    %105 = vmatprep.subr.mxu0 0.0
    %106 = vmatpush1.msra.mxu0 0.0
    %107 = vmatprep.subr.mxu0 0.0
    %108 = vmatpush1.msra.mxu0 0.0
    %109 = vmatprep.subr.mxu0 0.0
    %110 = vmatpush1.msra.mxu0 0.0
    %111 = vmatprep.subr.mxu0 0.0
    %112 = vmatpush1.msra.mxu0 0.0
    %113 = vmatprep.mubr.f32.mxu0 0.0
    %114 = vmatmul.mubr.f32.gmra.mrb[0].mxu0 %v41
    %v115 = vpop.f32.mrb[0].mxu0
    %v116 = vadd.f32 %v37, %v115
    %v117 = vpop.f32.mrb[0].mxu0
    %118 = vmatprep.mubr.f32.mxu0 0.0
    %119 = vmatmul.mubr.f32.gmra.mrb[0].mxu0 %v44
    %v120 = vpop.f32.mrb[0].mxu0
    %v121 = vadd.f32 %v37, %v120
    %v122 = vpop.f32.mrb[0].mxu0
    %123 = vmatprep.mubr.f32.mxu0 0.0
    %124 = vmatmul.mubr.f32.gmra.mrb[0].mxu0 %v47
    %v125 = vpop.f32.mrb[0].mxu0
    %v126 = vadd.f32 %v37, %v125
    %v127 = vpop.f32.mrb[0].mxu0
    %128 = vdwg.mxu0
    %v129 = vmax.f32 %v116, 0.0
    %v130 = vmax.f32 %v121, 0.0
    %v131 = vmax.f32 %v126, 0.0
    %v132 = vld [vmem:[%s3] sm:$0xf]
    %v133 = vld [vmem:[%s4] sm:$0x1]
    %v135 = vlaneseq
    %v136 = vshrl.u32 %v135, 7
    %v137 = vsub.s32 0, %v136
    %v138 = vrot.slane %v133, %v137
    %vm140 = vcmask 31744
    %v142 = vsel %vm140, %v129, 0
    %v145 = vsel %vm140, %v130, 0
    %v148 = vsel %vm140, %v131, 0
    %vm150 = vcmask 1043456
    %v152 = vsel %vm150, %v132, 0
    %154 = vmatprep.subr.mxu0 0.0
    %155 = vmatpush1.msra.mxu0 %v152
    %156 = vmatprep.subr.mxu0 0.0
    %157 = vmatpush1.msra.mxu0 0.0
    %158 = vmatprep.subr.mxu0 0.0
    %159 = vmatpush1.msra.mxu0 0.0
    %160 = vmatprep.subr.mxu0 0.0
    %161 = vmatpush1.msra.mxu0 0.0
    %162 = vmatprep.subr.mxu0 0.0
    %163 = vmatpush1.msra.mxu0 0.0
    %164 = vmatprep.subr.mxu0 0.0
    %165 = vmatpush1.msra.mxu0 0.0
    %166 = vmatprep.subr.mxu0 0.0
    %167 = vmatpush1.msra.mxu0 0.0
    %168 = vmatprep.subr.mxu0 0.0
    %169 = vmatpush1.msra.mxu0 0.0
    %170 = vmatprep.subr.mxu0 0.0
    %171 = vmatpush1.msra.mxu0 0.0
    %172 = vmatprep.subr.mxu0 0.0
    %173 = vmatpush1.msra.mxu0 0.0
    %174 = vmatprep.subr.mxu0 0.0
    %175 = vmatpush1.msra.mxu0 0.0
    %176 = vmatprep.subr.mxu0 0.0
    %177 = vmatpush1.msra.mxu0 0.0
    %178 = vmatprep.subr.mxu0 0.0
    %179 = vmatpush1.msra.mxu0 0.0
    %180 = vmatprep.subr.mxu0 0.0
    %181 = vmatpush1.msra.mxu0 0.0
    %182 = vmatprep.subr.mxu0 0.0
    %183 = vmatpush1.msra.mxu0 0.0
    %184 = vmatprep.subr.mxu0 0.0
    %185 = vmatpush1.msra.mxu0 0.0
    %186 = vmatprep.subr.mxu0 0.0
    %187 = vmatpush1.msra.mxu0 0.0
    %188 = vmatprep.subr.mxu0 0.0
    %189 = vmatpush1.msra.mxu0 0.0
    %190 = vmatprep.subr.mxu0 0.0
    %191 = vmatpush1.msra.mxu0 0.0
    %192 = vmatprep.subr.mxu0 0.0
    %193 = vmatpush1.msra.mxu0 0.0
    %194 = vmatprep.subr.mxu0 0.0
    %195 = vmatpush1.msra.mxu0 0.0
    %196 = vmatprep.subr.mxu0 0.0
    %197 = vmatpush1.msra.mxu0 0.0
    %198 = vmatprep.subr.mxu0 0.0
    %199 = vmatpush1.msra.mxu0 0.0
    %200 = vmatprep.subr.mxu0 0.0
    %201 = vmatpush1.msra.mxu0 0.0
    %202 = vmatprep.subr.mxu0 0.0
    %203 = vmatpush1.msra.mxu0 0.0
    %204 = vmatprep.subr.mxu0 0.0
    %205 = vmatpush1.msra.mxu0 0.0
    %206 = vmatprep.subr.mxu0 0.0
    %207 = vmatpush1.msra.mxu0 0.0
    %208 = vmatprep.subr.mxu0 0.0
    %209 = vmatpush1.msra.mxu0 0.0
    %210 = vmatprep.subr.mxu0 0.0
    %211 = vmatpush1.msra.mxu0 0.0
    %212 = vmatprep.subr.mxu0 0.0
    %213 = vmatpush1.msra.mxu0 0.0
    %214 = vmatprep.subr.mxu0 0.0
    %215 = vmatpush1.msra.mxu0 0.0
    %216 = vmatprep.subr.mxu0 0.0
    %217 = vmatpush1.msra.mxu0 0.0
    %218 = vmatprep.mubr.f32.mxu0 0.0
    %219 = vmatmul.mubr.f32.gmra.mrb[0].mxu0 %v142
    %v220 = vpop.f32.mrb[0].mxu0
    %v221 = vadd.f32 %v138, %v220
    %v222 = vpop.f32.mrb[0].mxu0
    %223 = vmatprep.mubr.f32.mxu0 0.0
    %224 = vmatmul.mubr.f32.gmra.mrb[0].mxu0 %v145
    %v225 = vpop.f32.mrb[0].mxu0
    %v226 = vadd.f32 %v138, %v225
    %v227 = vpop.f32.mrb[0].mxu0
    %228 = vmatprep.mubr.f32.mxu0 0.0
    %229 = vmatmul.mubr.f32.gmra.mrb[0].mxu0 %v148
    %v230 = vpop.f32.mrb[0].mxu0
    %v231 = vadd.f32 %v138, %v230
    %v232 = vpop.f32.mrb[0].mxu0
    %233 = vdwg.mxu0
    %v234 = vxor.u32 %v221, 2147483648
    %v235 = vxor.u32 %v226, 2147483648
    %v236 = vxor.u32 %v231, 2147483648
    %v237 = vmul.f32 %v234, 1.442695
    %v238 = vpow.pop %v237
    %v239 = vmul.f32 %v235, 1.442695
    %v240 = vpow.pop %v239
    %v241 = vmul.f32 %v236, 1.442695
    %v242 = vpow.pop %v241
    %v243 = vadd.f32 %v238, 1.0
    %v244 = vadd.f32 %v240, 1.0
    %v245 = vadd.f32 %v242, 1.0
    %v246 = vrcp.pop %v243
    %v247 = vmul.f32 1.0, %v246
    %v248 = vrcp.pop %v244
    %v249 = vmul.f32 1.0, %v248
    %v250 = vrcp.pop %v245
    %v251 = vmul.f32 1.0, %v250
    %252 = vst.msk [vmem:[#allocation2] sm:$0xff] %vm39, %v247
    %253 = vst.msk [vmem:[#allocation2 + $0x8] sm:$0xff] %vm39, %v249
    %254 = vst.msk [vmem:[#allocation2 + $0x10] sm:$0xff] %vm39, %v251
    // Predicated region
    $region22: #{tpu_custom_call.1} parent=1 // pred_check
      _
    $region23: #{tpu_custom_call.1} parent=1 // pred_check_branch
      %256 = sbr.rel (0) target = $region25
    $region24: #{tpu_custom_call.1} parent=1 // pred_region
      %s258 = ssub.s32 384, 384
      %259 = vsyncadd [#allocation3], %s258
      %s260 = sshll.u32 [#allocation2], 4
      %s261 = int_to_ptr.vmem [resolvable:$true] %s260
      %266 = dma.vmem_to_hbm [thread:$0]  %s261, 384, %s5, [#allocation3], 128, 128, 8
    $region25: #{tpu_custom_call.1} parent=1 // pred_fallthru
      _
    // Predicated region
    $region26: #{tpu_custom_call.1} parent=1 // pred_check
      _
    $region27: #{tpu_custom_call.1} parent=1 // pred_check_branch
      %268 = sbr.rel (0) target = $region29
    $region28: #{tpu_custom_call.1} parent=1 // pred_region
      %269 = dma.done [#allocation3], 384
    $region29: #{tpu_custom_call.1} parent=1 // pred_fallthru
      _
    %270 = vsyncpa [#allocation3], 1

</llo_original>
